<compile_context>
chip_gen: v6e
topology: v6e:2x2x1
jax: 0.10.0
libtpu: 0.0.40
codegen_flags: <defaults>
</compile_context>

<pallas_src>
import jax
import jax.numpy as jnp
from jax.experimental import pallas as pl
from jax.experimental.pallas import tpu as pltpu

EPS = 1e-6
VMEM_LIMIT_BYTES = 32 << 20            # explicit scoped-VMEM limit (<= 1/2 of v7x physical)
VMEM_TILE_BUDGET = VMEM_LIMIT_BYTES // 2  # budget for pipeline buffers + fp32 temps
MIN_GRID_STEPS = 4                     # keep several grid steps (v7x megacore sharding)


def _layernorm_kernel(alpha_ref, beta_ref, x_ref, o_ref):
    # alpha_ref/beta_ref: SMEM scalars (shape (1,)); x_ref/o_ref: (ROW_TILE, D) VMEM blocks.
    x = x_ref[...].astype(jnp.float32)
    d = x.shape[-1]
    mean = jnp.mean(x, axis=-1, keepdims=True)
    diff = x - mean
    # Unbiased std (Bessel's correction), matching torch.Tensor.std default.
    denom = jnp.float32(d - 1 if d > 1 else 1)  # guard d_model == 1
    var = jnp.sum(diff * diff, axis=-1, keepdims=True) / denom
    # Exact reciprocal: kernel is HBM-bound, so this is free and keeps accuracy
    # (approx=True was the source of the previous mismatch).
    inv = 1.0 / (jnp.sqrt(var) + jnp.float32(EPS))
    alpha = alpha_ref[0]
    beta = beta_ref[0]
    o_ref[...] = (alpha * (diff * inv) + beta).astype(o_ref.dtype)


def _choose_row_tile(rows, d, itemsize):
    """Largest sublane-aligned row tile that fits the VMEM budget and keeps a few grid steps."""
    # Honest per-row working set:
    #   2 input + 2 output pipeline buffers at the I/O dtype,
    #   ~3 live fp32 intermediates (x_f32, diff, diff*diff) in the elementwise tail.
    per_row_bytes = d * (4 * itemsize + 3 * 4)
    tile = VMEM_TILE_BUDGET // max(per_row_bytes, 1)
    # Keep >= MIN_GRID_STEPS grid steps when possible so the "parallel" axis can
    # shard across both TensorCores on v7x (no-op on single-TC v5e/v6e).
    tile = min(tile, max(1, pl.cdiv(rows, MIN_GRID_STEPS)))
    tile = min(tile, rows, 4096)
    # Sublane alignment: 8 rows for 4-byte dtypes, 16 for 2-byte, 32 for 1-byte.
    sub = {4: 8, 2: 16, 1: 32}.get(itemsize, 8)
    tile = max(sub, (tile // sub) * sub)
    return int(tile)


def pallas_layernorm(x, alpha, beta):
    """LayerNorm over the last axis of x (any leading shape)."""
    orig_shape = x.shape
    d = orig_shape[-1]
    x2 = x.reshape(-1, d)
    rows = x2.shape[0]
    itemsize = jnp.dtype(x.dtype).itemsize

    row_tile = _choose_row_tile(rows, d, itemsize)
    # Partial tail block is handled by Pallas (masked writes); reductions are
    # per-row so padding rows cannot contaminate valid output rows.
    grid = (pl.cdiv(rows, row_tile),)

    alpha1 = jnp.asarray(alpha, jnp.float32).reshape(1)
    beta1 = jnp.asarray(beta, jnp.float32).reshape(1)

    out = pl.pallas_call(
        _layernorm_kernel,
        out_shape=jax.ShapeDtypeStruct((rows, d), x.dtype),
        grid_spec=pltpu.PrefetchScalarGridSpec(
            num_scalar_prefetch=2,  # alpha, beta land in SMEM
            grid=grid,
            in_specs=[
                pl.BlockSpec((row_tile, d), lambda i, a, b: (i, 0)),
            ],
            out_specs=pl.BlockSpec((row_tile, d), lambda i, a, b: (i, 0)),
        ),
        compiler_params=pltpu.CompilerParams(
            dimension_semantics=("parallel",),
            vmem_limit_bytes=VMEM_LIMIT_BYTES,
        ),
    )(alpha1, beta1, x2)

    return out.reshape(orig_shape)


class Decoder:
    """JAX/Pallas port of the PyTorch Decoder module."""

    def __init__(self, layers):
        # layers: list of callables layer(x, encoder_op, src_mask, tgt_mask) -> x
        self.layers = layers
        # LayerNorm parameters (deterministic init, matching nn.Parameter defaults)
        self.alpha = jnp.ones((1,), jnp.float32)
        self.beta = jnp.zeros((1,), jnp.float32)

    def __call__(self, x, encoder_op, src_mask, tgt_mask):
        for layer in self.layers:
            x = layer(x, encoder_op, src_mask, tgt_mask)
        return pallas_layernorm(x, self.alpha, self.beta)


def _reference_layernorm(x, alpha, beta, eps=EPS):
    x = x.astype(jnp.float32)
    d = x.shape[-1]
    mean = jnp.mean(x, axis=-1, keepdims=True)
    var = jnp.sum((x - mean) ** 2, axis=-1, keepdims=True) / max(d - 1, 1)
    std = jnp.sqrt(var)
    return alpha * ((x - mean) / (std + eps)) + beta


if __name__ == "__main__":
    key = jax.random.PRNGKey(0)
    k1, k2, k3 = jax.random.split(key, 3)

    batch, seq, d_model = 2, 8, 32
    x = jax.random.normal(k1, (batch, seq, d_model), jnp.float32)
    encoder_op = jax.random.normal(k2, (batch, seq, d_model), jnp.float32)
    src_mask = jnp.ones((batch, 1, 1, seq), jnp.float32)
    tgt_mask = jnp.ones((batch, 1, seq, seq), jnp.float32)

    # Opaque layer stack (empty ModuleList equivalent); see TODO(synk) above.
    decoder = Decoder(layers=[])

    out = decoder(x, encoder_op, src_mask, tgt_mask)
    out = jax.block_until_ready(out)
    ref = _reference_layernorm(x, 1.0, 0.0)
    assert out.shape == x.shape
    assert jnp.allclose(out, ref, atol=1e-4, rtol=1e-4), "mismatch vs reference"

    # Second check: rows not divisible by the tile (exercises the partial tail block).
    x_odd = jax.random.normal(k3, (3, 5, d_model), jnp.float32)
    out_odd = jax.block_until_ready(
        pallas_layernorm(x_odd, decoder.alpha, decoder.beta)
    )
    ref_odd = _reference_layernorm(x_odd, 1.0, 0.0)
    assert out_odd.shape == x_odd.shape
    assert jnp.allclose(out_odd, ref_odd, atol=1e-4, rtol=1e-4), "mismatch (tail path)"

    print("KERNEL_OK")
</pallas_src>

<mosaic_0001>
module attributes {stable_mosaic.version = 11 : i64} {
  func.func @_layernorm_kernel(%arg0: i32, %arg1: memref<1xf32, #tpu.memory_space<smem>>, %arg2: memref<1xf32, #tpu.memory_space<smem>>, %arg3: memref<8x32xf32, #tpu.memory_space<vmem>>, %arg4: memref<8x32xf32, #tpu.memory_space<vmem>>) attributes {dimension_semantics = [#tpu.dimension_semantics<parallel>], iteration_bounds = array<i64: 2>, scalar_prefetch = 2 : i64, scratch_operands = 0 : i64, tpu.core_type = #tpu.core_type<tc>, window_params = [{transform_indices = @transform_0, window_bounds = array<i64: 8, 32>}, {transform_indices = @transform_1, window_bounds = array<i64: 8, 32>}]} {
    %c0 = arith.constant 0 : index
    %c0_0 = arith.constant 0 : index
    %0 = vector.load %arg3[%c0, %c0_0] : memref<8x32xf32, #tpu.memory_space<vmem>>, vector<8x32xf32>
    %cst = arith.constant dense<0.000000e+00> : vector<8xf32>
    %1 = vector.multi_reduction <add>, %0, %cst [1] : vector<8x32xf32> to vector<8xf32>
    %2 = vector.shape_cast %1 : vector<8xf32> to vector<8x1xf32>
    %cst_1 = arith.constant 3.200000e+01 : f32
    %3 = vector.broadcast %cst_1 : f32 to vector<8x1xf32>
    %4 = arith.divf %2, %3 : vector<8x1xf32>
    %5 = vector.broadcast %4 : vector<8x1xf32> to vector<8x32xf32>
    %6 = arith.subf %0, %5 : vector<8x32xf32>
    %7 = arith.mulf %6, %6 : vector<8x32xf32>
    %cst_2 = arith.constant dense<0.000000e+00> : vector<8xf32>
    %8 = vector.multi_reduction <add>, %7, %cst_2 [1] : vector<8x32xf32> to vector<8xf32>
    %9 = vector.shape_cast %8 : vector<8xf32> to vector<8x1xf32>
    %cst_3 = arith.constant 3.100000e+01 : f32
    %10 = vector.broadcast %cst_3 : f32 to vector<8x1xf32>
    %11 = arith.divf %9, %10 : vector<8x1xf32>
    %12 = math.sqrt %11 : vector<8x1xf32>
    %cst_4 = arith.constant 9.99999997E-7 : f32
    %13 = vector.broadcast %cst_4 : f32 to vector<8x1xf32>
    %14 = arith.addf %12, %13 : vector<8x1xf32>
    %cst_5 = arith.constant 1.000000e+00 : f32
    %15 = vector.broadcast %cst_5 : f32 to vector<8x1xf32>
    %16 = arith.divf %15, %14 : vector<8x1xf32>
    %c0_6 = arith.constant 0 : index
    %17 = memref.load %arg1[%c0_6] : memref<1xf32, #tpu.memory_space<smem>>
    %c0_7 = arith.constant 0 : index
    %18 = memref.load %arg2[%c0_7] : memref<1xf32, #tpu.memory_space<smem>>
    %19 = vector.broadcast %16 : vector<8x1xf32> to vector<8x32xf32>
    %20 = arith.mulf %6, %19 : vector<8x32xf32>
    %21 = vector.broadcast %17 : f32 to vector<8x32xf32>
    %22 = arith.mulf %21, %20 : vector<8x32xf32>
    %23 = vector.broadcast %18 : f32 to vector<8x32xf32>
    %24 = arith.addf %22, %23 : vector<8x32xf32>
    %c0_8 = arith.constant 0 : index
    %c0_9 = arith.constant 0 : index
    %25 = vector.load %arg4[%c0_8, %c0_9] : memref<8x32xf32, #tpu.memory_space<vmem>>, vector<8x32xf32>
    tpu.vector_store %arg4[%c0_8, %c0_9], %24 {strides = array<i32>} : memref<8x32xf32, #tpu.memory_space<vmem>>, vector<8x32xf32>,
    return
  }
  func.func @transform_0(%arg0: i32, %arg1: memref<1xf32, #tpu.memory_space<smem>>, %arg2: memref<1xf32, #tpu.memory_space<smem>>) -> (i32, i32) {
    %c0_i32 = arith.constant 0 : i32
    %c0_i32_0 = arith.constant 0 : i32
    return %arg0, %c0_i32 : i32, i32
  }
  func.func @transform_1(%arg0: i32, %arg1: memref<1xf32, #tpu.memory_space<smem>>, %arg2: memref<1xf32, #tpu.memory_space<smem>>) -> (i32, i32) {
    %c0_i32 = arith.constant 0 : i32
    %c0_i32_0 = arith.constant 0 : i32
    return %arg0, %c0_i32 : i32, i32
  }
}

</mosaic_0001>

<llo_original>
// kernel: tpu_custom_call.1
$region0: #{tpu_custom_call.1}
  #allocation0 [shape = 'u32[]', space=smem, size = 0x4, offset = 0x4, fixed_abs, tag = 'smem constant byte address 0x4 - core index']
  #allocation1 [shape = 'u32[144,128]{1,0:T(1,128)}', space=vmem, size = 0x12000, scoped, tag = 'internal scratch']
  #allocation2 [shape = 's32[1]{0}', space=sflag, size = 0x4, scoped, tag = 'scoped memory for tpu_custom_call.1']
  #allocation3 [shape = 'f32[1]{0:T(128)S(6)}', space=smem, size = 0x200, scoped, tag = 'prefetched SMEM operand 0']
  #allocation4 [shape = 'f32[1]{0:T(128)S(6)}', space=smem, size = 0x200, scoped, tag = 'prefetched SMEM operand 1']
  %s0 = inlined_call_operand.<no memory space> [shape: f32[1], index: 0, kind: input, shape index: {}]
  %s1 = inlined_call_operand.<no memory space> [shape: f32[1], index: 1, kind: input, shape index: {}]
  %s2 = inlined_call_operand.hbm [shape: f32[16,32], index: 2, kind: input, shape index: {}]
  %s3 = inlined_call_operand.hbm [shape: f32[16,32], index: 3, kind: output, shape index: {}]
  %s4 = sld [smem:[#allocation0]]
  $region41: #{tpu_custom_call.1} parent=0
    _
  %s6 = ssub.s32 1, %s4
  %s7 = scalar_select 0, %s6, %s4
  %8 = sst [smem:[#allocation3]] %s0
  %9 = sst [smem:[#allocation4]] %s1
  $region1: #{tpu_custom_call.1} parent=0
    #allocation5 [shape = 'u8[8192]{0}', space=vmem, size = 0x2000, scoped, tag = 'input window, operand 2']
    #allocation6 [shape = 's32[2]{0}', space=sflag, size = 0x8, scoped, tag = 'scoped memory for tpu_custom_call.1']
    #allocation7 [shape = 's32[2]{0}', space=sflag, size = 0x8, scoped, tag = 'scoped memory for tpu_custom_call.1']
    #allocation8 [shape = 'u8[8192]{0}', space=vmem, size = 0x2000, scoped, tag = 'output window, operand 0']
    %10 = vsyncpa [#allocation6], 0
    %s11 = scalar_lea.sflag [#allocation6], 1
    %12 = vsyncpa %s11, 0
    %13 = vsyncpa [#allocation7], 0
    %s14 = scalar_lea.sflag [#allocation7], 1
    %15 = vsyncpa %s14, 0
    loop: start=0, step=1, limit=4
    $region2: #{tpu_custom_call.1} parent=1 // loop_pre_header
      _
    $region3: #{tpu_custom_call.1} parent=1 // loop_header
      %s17 = sphi 0, %s21
      %p18 = scmp.ge.s32.totalorder %s17, 4
      %s27 = sphi 0, %s29
      %s30 = sphi 0, %s27
      %s31 = sphi 0, %s30
      %s47 = sphi 0, %s31
      %s53 = sphi 0, %s55
      %s56 = sphi 0, %s53
      %s57 = sphi 0, %s56
      %s73 = sphi 0, %s57
    $region4: #{tpu_custom_call.1} parent=1 // loop_header_branch
      %20 = sbr.rel (%p18) target = $region8
    $region5: #{tpu_custom_call.1} parent=1 // loop_body
      %s22 = ssub.s32 %s17, 1
      %s23 = ssub.s32 %s17, 2
      %s24 = sadd.s32 %s17, 1
      %s25 = ssub.s32 %s17, %s24
      %p26 = scmp.eq.s32.totalorder %s25, 0
      %s28 = sadd.s32 %s27, 1
      %s29 = scalar_select %p26, %s27, %s28
      %p32 = pneg %p26
      %p33 = scmp.eq.s32.totalorder %s17, 1
      %p34 = por %p32, %p33
      %p35 = scmp.ne.s32.totalorder %s27, %s30
      %p36 = scmp.eq.s32.totalorder %s17, 0
      %p37 = por %p35, %p36
      %p38 = scmp.ne.s32.totalorder %s27, %s30
      %p39 = scmp.eq.s32.totalorder %s22, 1
      %p40 = por %p38, %p39
      %p41 = scmp.ne.s32.totalorder %s30, %s31
      %p42 = scmp.eq.s32.totalorder %s22, 0
      %p43 = por %p41, %p42
      %p44 = scmp.ne.s32.totalorder %s30, %s31
      %p45 = scmp.eq.s32.totalorder %s23, 1
      %p46 = por %p44, %p45
      %p48 = scmp.ne.s32.totalorder %s31, %s47
      %p49 = scmp.eq.s32.totalorder %s23, 0
      %p50 = por %p48, %p49
      %s51 = ssub.s32 %s17, %s24
      %p52 = scmp.eq.s32.totalorder %s51, 0
      %s54 = sadd.s32 %s53, 1
      %s55 = scalar_select %p52, %s53, %s54
      %p58 = pneg %p52
      %p59 = scmp.eq.s32.totalorder %s17, 1
      %p60 = por %p58, %p59
      %p61 = scmp.ne.s32.totalorder %s53, %s56
      %p62 = scmp.eq.s32.totalorder %s17, 0
      %p63 = por %p61, %p62
      %p64 = scmp.ne.s32.totalorder %s53, %s56
      %p65 = scmp.eq.s32.totalorder %s22, 1
      %p66 = por %p64, %p65
      %p67 = scmp.ne.s32.totalorder %s56, %s57
      %p68 = scmp.eq.s32.totalorder %s22, 0
      %p69 = por %p67, %p68
      %p70 = scmp.ne.s32.totalorder %s56, %s57
      %p71 = scmp.eq.s32.totalorder %s23, 1
      %p72 = por %p70, %p71
      %p74 = scmp.ne.s32.totalorder %s57, %s73
      %p75 = scmp.eq.s32.totalorder %s23, 0
      %p76 = por %p74, %p75
      %p77 = scmp.le.s32.totalorder 1, %s17
      %p78 = scmp.lt.s32.totalorder %s17, 3
      %p79 = pnand %p77, %p78
      %p80 = pneg %p79
      // Predicated region
      $region9: #{tpu_custom_call.1} parent=5 // pred_check
        _
      $region10: #{tpu_custom_call.1} parent=5 // pred_check_branch
        %82 = sbr.rel (%p79) target = $region12
      $region11: #{tpu_custom_call.1} parent=5 // pred_region
        %s83 = ssub.s32 %s17, 1
      $region12: #{tpu_custom_call.1} parent=5 // pred_fallthru
        _
      %p84 = scmp.lt.s32.totalorder %s17, 2
      // Predicated region
      $region13: #{tpu_custom_call.1} parent=5 // pred_check
        %p85 = pneg %p84
      $region14: #{tpu_custom_call.1} parent=5 // pred_check_branch
        %87 = sbr.rel (%p85) target = $region16
      $region15: #{tpu_custom_call.1} parent=5 // pred_region
        // Predicated region
        $region17: #{tpu_custom_call.1} parent=15 // pred_check
          %p88 = pneg %p37
        $region18: #{tpu_custom_call.1} parent=15 // pred_check_branch
          %90 = sbr.rel (%p88) target = $region20
        $region19: #{tpu_custom_call.1} parent=15 // pred_region
          %s91 = sand.u32 %s27, 1
          %s92 = scalar_lea.sflag [#allocation6], %s91
          %s93 = sand.u32 %s27, 1
          %s94 = smul.addr %s93, 8
          %s95 = scalar_lea.vmem [#allocation5], %s94
          %s97 = ssub.s32 128, 128
          %98 = vsyncadd %s92, %s97
          %s99 = smul.addr %s17, 128
          %s100 = scalar_lea.hbm %s2, %s99
          %s102 = sshll.u32 %s95, 4
          %s103 = int_to_ptr.vmem [resolvable:$true] %s102
          %105 = dma.hbm_to_vmem [thread:$0]  %s100, 128, %s103, %s92
        $region20: #{tpu_custom_call.1} parent=15 // pred_fallthru
          _
      $region16: #{tpu_custom_call.1} parent=5 // pred_fallthru
        _
      %p106 = scmp.le.s32.totalorder 1, %s17
      %p107 = scmp.lt.s32.totalorder %s17, 3
      %p108 = pnand %p106, %p107
      %p109 = pneg %p108
      // Predicated region
      $region21: #{tpu_custom_call.1} parent=5 // pred_check
        _
      $region22: #{tpu_custom_call.1} parent=5 // pred_check_branch
        %111 = sbr.rel (%p108) target = $region24
      $region23: #{tpu_custom_call.1} parent=5 // pred_region
        %s112 = ssub.s32 %s17, 1
        %s113 = sand.u32 %s30, 1
        %s114 = scalar_lea.sflag [#allocation6], %s113
        %s115 = sand.u32 %s30, 1
        %s116 = smul.addr %s115, 8
        %s117 = scalar_lea.vmem [#allocation5], %s116
        // Predicated region
        $region25: #{tpu_custom_call.1} parent=23 // pred_check
          %p118 = pneg %p43
        $region26: #{tpu_custom_call.1} parent=23 // pred_check_branch
          %120 = sbr.rel (%p118) target = $region28
        $region27: #{tpu_custom_call.1} parent=23 // pred_region
          %121 = dma.done %s114, 128
        $region28: #{tpu_custom_call.1} parent=23 // pred_fallthru
          _
        %s122 = sand.u32 %s30, 1
        %s123 = scalar_lea.sflag [#allocation6], %s122
        %s124 = sand.u32 %s30, 1
        %s125 = smul.addr %s124, 8
        %s126 = scalar_lea.vmem [#allocation5], %s125
        %p127 = pneg %p43
        %p128 = pneg %p40
        %p129 = pneg %p69
        %p130 = pneg %p66
        %s131 = sand.u32 %s56, 1
        %s132 = scalar_lea.sflag [#allocation7], %s131
        %s133 = sand.u32 %s56, 1
        %s134 = smul.addr %s133, 8
        %s135 = scalar_lea.vmem [#allocation8], %s134
        %v136 = vld [vmem:[%s117] sm:$0xff]
        %vm137 = vcmask 261120
        %v138 = vsel %vm137, %v136, 0.0
        %139 = vadd.xlane.f32.xlu0 %v138
        %v140 = vpop.xlane.xlu0 %139
        %v141 = vrcp.pop 32.0
        %v142 = vmul.f32 %v140, %v141
        %v143 = vsub.f32 %v136, %v142
        %v144 = vmul.f32 %v143, %v143
        %v145 = vsel %vm137, %v144, 0.0
        %146 = vadd.xlane.f32.xlu0 %v145
        %v147 = vpop.xlane.xlu0 %146
        %v148 = vrcp.pop 31.0
        %v149 = vmul.f32 %v147, %v148
        %v150 = vrsqrt.pop %v149
        %v151 = vmul.f32 %v149, %v150
        %vm152 = vcmp.eq.f32.partialorder %v149, inf
        %v153 = vsel %vm152, %v149, %v151
        %vm154 = vcmp.eq.f32.partialorder %v149, 0.0
        %v155 = vand.u32 %v149, 2147483648
        %v156 = vsel %vm154, %v155, %v153
        %v157 = vadd.f32 %v156, 1e-06
        %v158 = vrcp.pop %v157
        %v159 = vmul.f32 1.0, %v158
        %s160 = sld [smem:[#allocation3]]
        %s161 = sld [smem:[#allocation4]]
        %v162 = vmul.f32 %v143, %v159
        %v163 = vstv %s160
        %v164 = vmul.f32 %v163, %v162
        %v165 = vstv %s161
        %v166 = vadd.f32 %v164, %v165
        %167 = vst.msk [vmem:[%s135] sm:$0xff] %vm137, %v166
        %s168 = sand.u32 %s56, 1
        %s169 = scalar_lea.sflag [#allocation7], %s168
        %s170 = sand.u32 %s56, 1
        %s171 = smul.addr %s170, 8
        %s172 = scalar_lea.vmem [#allocation8], %s171
        // Predicated region
        $region29: #{tpu_custom_call.1} parent=23 // pred_check
          %p173 = pneg %p66
        $region30: #{tpu_custom_call.1} parent=23 // pred_check_branch
          %175 = sbr.rel (%p173) target = $region32
        $region31: #{tpu_custom_call.1} parent=23 // pred_region
          %s177 = ssub.s32 128, 128
          %178 = vsyncadd %s169, %s177
          %s179 = smul.addr %s22, 128
          %s180 = scalar_lea.hbm %s3, %s179
          %s182 = sshll.u32 %s172, 4
          %s183 = int_to_ptr.vmem [resolvable:$true] %s182
          %185 = dma.vmem_to_hbm [thread:$0]  %s183, 128, %s180, %s169
        $region32: #{tpu_custom_call.1} parent=23 // pred_fallthru
          _
      $region24: #{tpu_custom_call.1} parent=5 // pred_fallthru
        _
      %p186 = scmp.le.s32.totalorder 2, %s17
      // Predicated region
      $region33: #{tpu_custom_call.1} parent=5 // pred_check
        %p187 = pneg %p186
      $region34: #{tpu_custom_call.1} parent=5 // pred_check_branch
        %189 = sbr.rel (%p187) target = $region36
      $region35: #{tpu_custom_call.1} parent=5 // pred_region
        %s190 = ssub.s32 %s17, 2
        // Predicated region
        $region37: #{tpu_custom_call.1} parent=35 // pred_check
          %p191 = pneg %p72
        $region38: #{tpu_custom_call.1} parent=35 // pred_check_branch
          %193 = sbr.rel (%p191) target = $region40
        $region39: #{tpu_custom_call.1} parent=35 // pred_region
          %s194 = sand.u32 %s57, 1
          %s195 = scalar_lea.sflag [#allocation7], %s194
          %s196 = sand.u32 %s57, 1
          %s197 = smul.addr %s196, 8
          %s198 = scalar_lea.vmem [#allocation8], %s197
          %199 = dma.done %s195, 128
        $region40: #{tpu_custom_call.1} parent=35 // pred_fallthru
          _
      $region36: #{tpu_custom_call.1} parent=5 // pred_fallthru
        _
    $region6: #{tpu_custom_call.1} parent=1 // loop_footer
      %s21 = sadd.s32 1, %s17
    $region7: #{tpu_custom_call.1} parent=1 // loop_footer_branch
      %16 = sbr.rel target = $region3
    $region8: #{tpu_custom_call.1} parent=1 // loop_exit
      _
    %200 = vsyncpa [#allocation6], 1
    %s201 = scalar_lea.sflag [#allocation6], 1
    %202 = vsyncpa %s201, 1
    %203 = vsyncpa [#allocation7], 1
    %s204 = scalar_lea.sflag [#allocation7], 1
    %205 = vsyncpa %s204, 1

</llo_original>
